<compile_context>
chip_gen: v6e
topology: v6e:2x2x1
jax: 0.10.0
libtpu: 0.0.40
codegen_flags: <defaults>
</compile_context>

<pallas_src>
import functools

import jax
import jax.numpy as jnp
from jax.experimental import pallas as pl
from jax.experimental.pallas import tpu as pltpu


def _round_up(x, m):
    return ((x + m - 1) // m) * m


# --------------------------------------------------------------------------- #
# Kernels
# --------------------------------------------------------------------------- #
def _gfp_rows_kernel(x_ref, w_ref, out_ref):
    # Direct layout.  x_ref: (TB, 1) f32, w_ref: (1, H) f32 (W*2pi, resident),
    # out_ref: (TB, 2H).  Half-width compute, two half-width stores.
    H = w_ref.shape[1]
    t = x_ref[...] * w_ref[...]                          # (TB, H) f32
    out_ref[:, :H] = jnp.sin(t).astype(out_ref.dtype)
    out_ref[:, H:] = jnp.cos(t).astype(out_ref.dtype)


def _gfp_cols_kernel(x_ref, w_ref, out_ref):
    # Transposed layout (batch on the lane axis).  x_ref: (1, TB) f32,
    # w_ref: (H, 1) f32 (W*2pi, resident), out_ref: (2H, TB) -> lane-dense stores.
    H = w_ref.shape[0]
    t = w_ref[...] * x_ref[...]                          # (H, TB) f32
    out_ref[:H, :] = jnp.sin(t).astype(out_ref.dtype)
    out_ref[H:, :] = jnp.cos(t).astype(out_ref.dtype)


# --------------------------------------------------------------------------- #
# Wrapper
# --------------------------------------------------------------------------- #
@functools.partial(jax.jit,
                   static_argnames=("out_dtype", "block_rows", "block_cols"))
def _gfp_forward(x, w_row, w_col, *, out_dtype=jnp.float32,
                 block_rows=1024, block_cols=4096):
    """x: (B,) timesteps. Returns (B, 2H) in `out_dtype` (compute is f32)."""
    B = x.shape[0]
    H = w_row.shape[1]
    E = 2 * H
    x32 = x.astype(jnp.float32)

    if E >= 128:
        # ---- Direct (B, 2H) layout. Half stores are 128-lane aligned for E>=256.
        # block_rows=1024 keeps the double-buffered out tile small (e.g. 8 MiB at
        # E=512), well inside v7x's 32 MiB scoped / 64 MiB physical VMEM.
        TB = min(block_rows, _round_up(B, 16))           # 16: bf16-safe sublane tile
        if B > 16:
            TB = min(TB, _round_up(pl.cdiv(B, 2), 16))   # >=2 grid steps -> both v7x TCs
        if TB >= B:
            TB = B                                       # single full block
        grid = (pl.cdiv(B, TB),)                         # ragged last block OK
        return pl.pallas_call(
            _gfp_rows_kernel,
            out_shape=jax.ShapeDtypeStruct((B, E), out_dtype),
            grid=grid,
            in_specs=[
                pl.BlockSpec((TB, 1), lambda i: (i, 0)),   # x row-tile
                pl.BlockSpec((1, H), lambda i: (0, 0)),    # W*2pi, resident
            ],
            out_specs=pl.BlockSpec((TB, E), lambda i: (i, 0)),
            compiler_params=pltpu.CompilerParams(
                dimension_semantics=("parallel",)),
        )(x32.reshape(B, 1), w_row)

    # ---- Small embed dim: transposed (2H, B) layout, batch on the lane axis so
    # stores are unmasked 128-lane `vst`s and the x tile is lane-dense too.
    TB = min(block_cols, _round_up(B, 128))
    if B > 128:
        TB = min(TB, _round_up(pl.cdiv(B, 2), 128))      # >=2 grid steps on v7x
    if TB >= B:
        TB = B                                           # single full block
    grid = (pl.cdiv(B, TB),)                             # ragged last block OK
    out_t = pl.pallas_call(
        _gfp_cols_kernel,
        out_shape=jax.ShapeDtypeStruct((E, B), out_dtype),
        grid=grid,
        in_specs=[
            pl.BlockSpec((1, TB), lambda i: (0, i)),       # x column-tile
            pl.BlockSpec((H, 1), lambda i: (0, 0)),        # W*2pi, resident
        ],
        out_specs=pl.BlockSpec((E, TB), lambda i: (0, i)),
        compiler_params=pltpu.CompilerParams(
            dimension_semantics=("parallel",)),
    )(x32.reshape(1, B), w_col)
    # Module semantics require (B, 2H); this transpose is cheap for small E and
    # can be dropped if the consumer accepts the (2H, B) layout.
    return out_t.T


class GaussianFourierProjection:
    """Gaussian random features for encoding time steps (Pallas TPU forward)."""

    def __init__(self, embed_dim, scale=30.0, *, key=None, W=None,
                 out_dtype=jnp.float32):
        H = embed_dim // 2
        if W is None:
            W = jax.random.normal(key, (H,), dtype=jnp.float32) * scale
        self.W = W.astype(jnp.float32)
        # Fold 2*pi once at init; keep both layouts resident (hoisted out of the
        # per-step call so the wrapper adds zero extra HLO ops each step).
        w2pi = self.W * (2.0 * jnp.pi)
        self.w_row = w2pi.reshape(1, H)
        self.w_col = w2pi.reshape(H, 1)
        self.out_dtype = out_dtype

    def __call__(self, x):
        return _gfp_forward(x, self.w_row, self.w_col, out_dtype=self.out_dtype)


# --------------------------------------------------------------------------- #
# Reference + tests
# --------------------------------------------------------------------------- #
def reference(x, W):
    """Direct transcription of the PyTorch forward."""
    proj = x[:, None].astype(jnp.float32) * W[None, :].astype(jnp.float32) * 2.0 * jnp.pi
    return jnp.concatenate([jnp.sin(proj), jnp.cos(proj)], axis=-1)


if __name__ == "__main__":
    key = jax.random.PRNGKey(0)
    k_w1, k_w2, k_x1, k_x2, k_x3 = jax.random.split(key, 5)

    # Folding 2*pi into W reorders f32 rounding slightly vs. the naive reference.
    ATOL, RTOL = 5e-4, 1e-4

    # Case 1: embed_dim=32 (2H < 128) -> transposed lane-dense layout, single tile.
    gfp32 = GaussianFourierProjection(32, scale=30.0, key=k_w1)
    x1 = jax.random.uniform(k_x1, (8,), dtype=jnp.float32)
    out1 = jax.block_until_ready(gfp32(x1))
    assert out1.shape == (8, 32), out1.shape
    assert jnp.allclose(out1, reference(x1, gfp32.W), atol=ATOL, rtol=RTOL), "case 1"

    # Case 2: non-multiple-of-tile batch -> multi-step grid with a ragged last
    # block (no wrapper pad, no output slice).
    x2 = jax.random.uniform(k_x2, (300,), dtype=jnp.float32)
    out2 = jax.block_until_ready(gfp32(x2))
    assert out2.shape == (300, 32), out2.shape
    assert jnp.all(jnp.isfinite(out2))
    assert jnp.allclose(out2, reference(x2, gfp32.W), atol=ATOL, rtol=RTOL), "case 2"

    # Case 3: embed_dim=256 (2H >= 128) -> direct layout, lane-aligned half stores.
    gfp256 = GaussianFourierProjection(256, scale=30.0, key=k_w2)
    x3 = jax.random.uniform(k_x3, (300,), dtype=jnp.float32)
    out3 = jax.block_until_ready(gfp256(x3))
    assert out3.shape == (300, 256), out3.shape
    assert jnp.allclose(out3, reference(x3, gfp256.W), atol=ATOL, rtol=RTOL), "case 3"

    # Case 4: bf16 output (compute f32 in-kernel, cast on store) -> halves writeback bytes.
    gfp256_bf16 = GaussianFourierProjection(256, scale=30.0, key=k_w2,
                                            out_dtype=jnp.bfloat16)
    out4 = jax.block_until_ready(gfp256_bf16(x3))
    assert out4.shape == (300, 256) and out4.dtype == jnp.bfloat16
    assert jnp.allclose(out4.astype(jnp.float32), reference(x3, gfp256_bf16.W),
                        atol=2e-2, rtol=1e-2), "case 4"

    print("KERNEL_OK")
</pallas_src>

<mosaic_0001>
module attributes {stable_mosaic.version = 11 : i64} {
  func.func @_gfp_cols_kernel(%arg0: i32, %arg1: memref<1x8xf32, #tpu.memory_space<vmem>>, %arg2: memref<16x1xf32, #tpu.memory_space<vmem>>, %arg3: memref<32x8xf32, #tpu.memory_space<vmem>>) attributes {dimension_semantics = [#tpu.dimension_semantics<parallel>], iteration_bounds = array<i64: 1>, scalar_prefetch = 0 : i64, scratch_operands = 0 : i64, tpu.core_type = #tpu.core_type<tc>, window_params = [{transform_indices = @transform_0, window_bounds = array<i64: 1, 8>}, {pipeline_mode = #tpu.pipeline_mode<synchronous>, transform_indices = @transform_1, window_bounds = array<i64: 16, 1>}, {transform_indices = @transform_2, window_bounds = array<i64: 32, 8>}]} {
    %c0 = arith.constant 0 : index
    %c0_0 = arith.constant 0 : index
    %0 = vector.load %arg2[%c0, %c0_0] : memref<16x1xf32, #tpu.memory_space<vmem>>, vector<16x1xf32>
    %c0_1 = arith.constant 0 : index
    %c0_2 = arith.constant 0 : index
    %1 = vector.load %arg1[%c0_1, %c0_2] : memref<1x8xf32, #tpu.memory_space<vmem>>, vector<1x8xf32>
    %2 = vector.broadcast %0 : vector<16x1xf32> to vector<16x8xf32>
    %3 = vector.broadcast %1 : vector<1x8xf32> to vector<16x8xf32>
    %4 = arith.mulf %2, %3 : vector<16x8xf32>
    %5 = math.sin %4 : vector<16x8xf32>
    %c0_3 = arith.constant 0 : index
    %c0_4 = arith.constant 0 : index
    %6 = vector.load %arg3[%c0_3, %c0_4] : memref<32x8xf32, #tpu.memory_space<vmem>>, vector<16x8xf32>
    tpu.vector_store %arg3[%c0_3, %c0_4], %5 {strides = array<i32>} : memref<32x8xf32, #tpu.memory_space<vmem>>, vector<16x8xf32>,
    %7 = math.cos %4 : vector<16x8xf32>
    %c16 = arith.constant 16 : index
    %c0_5 = arith.constant 0 : index
    %8 = vector.load %arg3[%c16, %c0_5] : memref<32x8xf32, #tpu.memory_space<vmem>>, vector<16x8xf32>
    tpu.vector_store %arg3[%c16, %c0_5], %7 {strides = array<i32>} : memref<32x8xf32, #tpu.memory_space<vmem>>, vector<16x8xf32>,
    return
  }
  func.func @transform_0(%arg0: i32) -> (i32, i32) {
    %c0_i32 = arith.constant 0 : i32
    %c0_i32_0 = arith.constant 0 : i32
    return %c0_i32, %arg0 : i32, i32
  }
  func.func @transform_1(%arg0: i32) -> (i32, i32) {
    %c0_i32 = arith.constant 0 : i32
    %c0_i32_0 = arith.constant 0 : i32
    %c0_i32_1 = arith.constant 0 : i32
    return %c0_i32, %c0_i32_0 : i32, i32
  }
  func.func @transform_2(%arg0: i32) -> (i32, i32) {
    %c0_i32 = arith.constant 0 : i32
    %c0_i32_0 = arith.constant 0 : i32
    return %c0_i32, %arg0 : i32, i32
  }
}

</mosaic_0001>

<llo_original>
// kernel: _gfp_forward.1
$region0: #{_gfp_forward.1}
  #allocation0 [shape = 'u32[]', space=smem, size = 0x4, offset = 0x4, fixed_abs, tag = 'smem constant byte address 0x4 - core index']
  #allocation1 [shape = 'u32[144,128]{1,0:T(1,128)}', space=vmem, size = 0x12000, scoped, tag = 'internal scratch']
  %s0 = inlined_call_operand.vmem [shape: f32[1,8], index: 0, kind: input, shape index: {}]
  %s1 = inlined_call_operand.vmem [shape: f32[16,1], index: 1, kind: input, shape index: {}]
  %s2 = inlined_call_operand.vmem [shape: f32[32,8], index: 2, kind: output, shape index: {}]
  %s3 = sld [smem:[#allocation0]]
  $region18: #{_gfp_forward.1} parent=0
    _
  %s5 = ssub.s32 1, %s3
  %s6 = scalar_select 0, %s5, %s3
  // Predicated region
  $region2: #{_gfp_forward.1} parent=0 // pred_check
    _
  $region3: #{_gfp_forward.1} parent=0 // pred_check_branch
    %8 = sbr.rel (0) target = $region5
  $region4: #{_gfp_forward.1} parent=0 // pred_region
    _
  $region5: #{_gfp_forward.1} parent=0 // pred_fallthru
    _
  // Predicated region
  $region6: #{_gfp_forward.1} parent=0 // pred_check
    _
  $region7: #{_gfp_forward.1} parent=0 // pred_check_branch
    %10 = sbr.rel (0) target = $region9
  $region8: #{_gfp_forward.1} parent=0 // pred_region
    _
  $region9: #{_gfp_forward.1} parent=0 // pred_fallthru
    _
  %v11 = vld [vmem:[%s1] sm:$0xff]
  %v12 = vld [vmem:[%s1 + $0x8] sm:$0xff]
  %v13 = vld [vmem:[%s0] sm:$0x1]
  %15 = vset.pattern.permute.xlu0 0
  %16 = vperm.xlu0 %15, %v11
  %v17 = vpop.permute.xlu0 %16
  %20 = vset.pattern.permute.xlu0 0
  %21 = vperm.xlu0 %20, %v12
  %v22 = vpop.permute.xlu0 %21
  %v25 = vlaneseq
  %v26 = vshrl.u32 %v25, 7
  %v27 = vsub.s32 0, %v26
  %v28 = vrot.slane %v13, %v27
  %v30 = vmul.f32 %v17, %v28
  %v31 = vmul.f32 %v22, %v28
  %v32 = vand.u32 2147483647, %v30
  %vm33 = vcmp.le.f32.partialorder %v32, 0.7853982
  %vm34 = vcmp.lt.s32.totalorder %v30, 0
  %v35 = vand.u32 %v30, 2139095040
  %v36 = vshrl.u32 %v35, 23
  %v37 = vsub.s32 %v36, 127
  %v38 = vand.u32 2147483647, %v30
  %v39 = vand.u32 %v38, 8388607
  %v40 = vor.u32 %v39, 8388608
  %v41 = vsub.s32 0, %v40
  %v42 = vadd.s32 %v37, 1
  %vm43 = vcmp.gt.s32.totalorder %v42, 0
  %v44 = vsel %vm43, %v42, 0
  %v45 = vshrl.u32 %v44, 5
  %v46 = vand.u32 %v44, 31
  %v47 = vsub.s32 32, %v46
  %v48 = vshrl.u32 683565275, %v47
  %v49 = vshll.u32 683565275, %v46
  %v50 = vshrl.u32 2475754826, %v47
  %v51 = vor.u32 %v49, %v50
  %v52 = vshll.u32 2475754826, %v46
  %v53 = vshrl.u32 2131351028, %v47
  %v54 = vor.u32 %v52, %v53
  %v55 = vshll.u32 2131351028, %v46
  %v56 = vshrl.u32 2102212464, %v47
  %v57 = vor.u32 %v55, %v56
  %v58 = vshll.u32 2102212464, %v46
  %v59 = vshrl.u32 920167782, %v47
  %v60 = vor.u32 %v58, %v59
  %v61 = vshll.u32 920167782, %v46
  %v62 = vshrl.u32 1326507024, %v47
  %v63 = vor.u32 %v61, %v62
  %vm64 = vcmp.lt.s32.totalorder %v45, 1
  %vm65 = vcmp.lt.s32.totalorder %v45, 2
  %vm66 = vcmp.lt.s32.totalorder %v45, 3
  %vm67 = vcmp.lt.s32.totalorder %v45, 4
  %v68 = vsel %vm64, %v48, %v51
  %v69 = vsel %vm67, %v57, 2102212464
  %v70 = vsel %vm66, %v54, %v69
  %v71 = vsel %vm65, %v68, %v70
  %v72 = vsel %vm64, %v51, %v54
  %v73 = vsel %vm67, %v60, 920167782
  %v74 = vsel %vm66, %v57, %v73
  %v75 = vsel %vm65, %v72, %v74
  %v76 = vsel %vm64, %v54, %v57
  %v77 = vsel %vm67, %v63, 1326507024
  %v78 = vsel %vm66, %v60, %v77
  %v79 = vsel %vm65, %v76, %v78
  %v80 = vshll.u32 %v40, 8
  %v81 = vmul.u32.u64.compose %v80, %v79
  %v82 = vextract.low.u32 %v81
  %v83 = vextract.high.u32 %v81
  %v84 = vmul.u32.u64.compose %v80, %v75
  %v85 = vextract.low.u32 %v84
  %v86 = vextract.high.u32 %v84
  %v87 = vmul.u32 %v80, %v71
  %v88 = vadd.s32 %v83, %v85
  %vm89 = vc.u32 %v83, %v85
  %v90 = vadd.s32 %v86, 1
  %v91 = vsel %vm89, %v90, %v86
  %v92 = vadd.s32 %v87, %v91
  %v93 = vadd.s32 %v92, 536870912
  %v94 = vshrl.u32 %v93, 30
  %v95 = vshll.u32 %v94, 30
  %v96 = vsub.s32 %v92, %v95
  %vm97 = vcmp.lt.s32.totalorder %v96, 0
  %v98 = vsub.s32 0, %v96
  %v99 = vsel %vm97, %v98, %v96
  %v100 = vclz %v99
  %v101 = vsub.s32 %v100, 2
  %vm102 = vcmp.gt.s32.totalorder 0, %v101
  %v103 = vsel %vm102, 0, %v101
  %v104 = vsub.s32 32, %v103
  %v105 = vshll.u32 %v96, %v103
  %v106 = vshrl.u32 %v88, %v104
  %v107 = vor.u32 %v105, %v106
  %v108 = vsub.s32 4294967266, %v103
  %v109 = vadd.s32 %v108, 127
  %v110 = vshll.u32 %v109, 23
  %v111 = vor.u32 4788187, %v110
  %v112 = vand.u32 2147483647, %v111
  %v114 = vcvt.s32.f32 %v107
  %v115 = vmul.f32 %v114, %v112
  %v116 = vxor.u32 %v115, 2147483648
  %v117 = vsel %vm34, %v116, %v115
  %v118 = vsub.s32 4, %v94
  %v119 = vsel %vm34, %v118, %v94
  %v120 = vsel %vm33, %v30, %v117
  %v121 = vsel %vm33, 0, %v119
  %v122 = vcosq.f32.pop %v120
  %v123 = vsinq.f32.pop %v120
  %vm124 = vweird.f32 %v30
  %v125 = vadd.s32 %v121, 3
  %v126 = vand.u32 %v125, 3
  %vm127 = vcmp.lt.s32.totalorder %v126, 2
  %vm128 = vcmp.eq.s32.totalorder %v126, 0
  %v129 = vxor.u32 %v123, 2147483648
  %v130 = vsel %vm128, %v122, %v129
  %vm131 = vcmp.eq.s32.totalorder %v126, 2
  %v132 = vxor.u32 %v122, 2147483648
  %v133 = vsel %vm131, %v132, %v123
  %v134 = vsel %vm127, %v130, %v133
  %v135 = vsel %vm124, nan, %v134
  %v136 = vand.u32 2147483647, %v31
  %vm137 = vcmp.le.f32.partialorder %v136, 0.7853982
  %vm138 = vcmp.lt.s32.totalorder %v31, 0
  %v139 = vand.u32 %v31, 2139095040
  %v140 = vshrl.u32 %v139, 23
  %v141 = vsub.s32 %v140, 127
  %v142 = vand.u32 2147483647, %v31
  %v143 = vand.u32 %v142, 8388607
  %v144 = vor.u32 %v143, 8388608
  %v145 = vsub.s32 0, %v144
  %v146 = vadd.s32 %v141, 1
  %vm147 = vcmp.gt.s32.totalorder %v146, 0
  %v148 = vsel %vm147, %v146, 0
  %v149 = vshrl.u32 %v148, 5
  %v150 = vand.u32 %v148, 31
  %v151 = vsub.s32 32, %v150
  %v152 = vshrl.u32 683565275, %v151
  %v153 = vshll.u32 683565275, %v150
  %v154 = vshrl.u32 2475754826, %v151
  %v155 = vor.u32 %v153, %v154
  %v156 = vshll.u32 2475754826, %v150
  %v157 = vshrl.u32 2131351028, %v151
  %v158 = vor.u32 %v156, %v157
  %v159 = vshll.u32 2131351028, %v150
  %v160 = vshrl.u32 2102212464, %v151
  %v161 = vor.u32 %v159, %v160
  %v162 = vshll.u32 2102212464, %v150
  %v163 = vshrl.u32 920167782, %v151
  %v164 = vor.u32 %v162, %v163
  %v165 = vshll.u32 920167782, %v150
  %v166 = vshrl.u32 1326507024, %v151
  %v167 = vor.u32 %v165, %v166
  %vm168 = vcmp.lt.s32.totalorder %v149, 1
  %vm169 = vcmp.lt.s32.totalorder %v149, 2
  %vm170 = vcmp.lt.s32.totalorder %v149, 3
  %vm171 = vcmp.lt.s32.totalorder %v149, 4
  %v172 = vsel %vm168, %v152, %v155
  %v173 = vsel %vm171, %v161, 2102212464
  %v174 = vsel %vm170, %v158, %v173
  %v175 = vsel %vm169, %v172, %v174
  %v176 = vsel %vm168, %v155, %v158
  %v177 = vsel %vm171, %v164, 920167782
  %v178 = vsel %vm170, %v161, %v177
  %v179 = vsel %vm169, %v176, %v178
  %v180 = vsel %vm168, %v158, %v161
  %v181 = vsel %vm171, %v167, 1326507024
  %v182 = vsel %vm170, %v164, %v181
  %v183 = vsel %vm169, %v180, %v182
  %v184 = vshll.u32 %v144, 8
  %v185 = vmul.u32.u64.compose %v184, %v183
  %v186 = vextract.low.u32 %v185
  %v187 = vextract.high.u32 %v185
  %v188 = vmul.u32.u64.compose %v184, %v179
  %v189 = vextract.low.u32 %v188
  %v190 = vextract.high.u32 %v188
  %v191 = vmul.u32 %v184, %v175
  %v192 = vadd.s32 %v187, %v189
  %vm193 = vc.u32 %v187, %v189
  %v194 = vadd.s32 %v190, 1
  %v195 = vsel %vm193, %v194, %v190
  %v196 = vadd.s32 %v191, %v195
  %v197 = vadd.s32 %v196, 536870912
  %v198 = vshrl.u32 %v197, 30
  %v199 = vshll.u32 %v198, 30
  %v200 = vsub.s32 %v196, %v199
  %vm201 = vcmp.lt.s32.totalorder %v200, 0
  %v202 = vsub.s32 0, %v200
  %v203 = vsel %vm201, %v202, %v200
  %v204 = vclz %v203
  %v205 = vsub.s32 %v204, 2
  %vm206 = vcmp.gt.s32.totalorder 0, %v205
  %v207 = vsel %vm206, 0, %v205
  %v208 = vsub.s32 32, %v207
  %v209 = vshll.u32 %v200, %v207
  %v210 = vshrl.u32 %v192, %v208
  %v211 = vor.u32 %v209, %v210
  %v212 = vsub.s32 4294967266, %v207
  %v213 = vadd.s32 %v212, 127
  %v214 = vshll.u32 %v213, 23
  %v215 = vor.u32 4788187, %v214
  %v216 = vand.u32 2147483647, %v215
  %v218 = vcvt.s32.f32 %v211
  %v219 = vmul.f32 %v218, %v216
  %v220 = vxor.u32 %v219, 2147483648
  %v221 = vsel %vm138, %v220, %v219
  %v222 = vsub.s32 4, %v198
  %v223 = vsel %vm138, %v222, %v198
  %v224 = vsel %vm137, %v31, %v221
  %v225 = vsel %vm137, 0, %v223
  %v226 = vcosq.f32.pop %v224
  %v227 = vsinq.f32.pop %v224
  %vm228 = vweird.f32 %v31
  %v229 = vadd.s32 %v225, 3
  %v230 = vand.u32 %v229, 3
  %vm231 = vcmp.lt.s32.totalorder %v230, 2
  %vm232 = vcmp.eq.s32.totalorder %v230, 0
  %v233 = vxor.u32 %v227, 2147483648
  %v234 = vsel %vm232, %v226, %v233
  %vm235 = vcmp.eq.s32.totalorder %v230, 2
  %v236 = vxor.u32 %v226, 2147483648
  %v237 = vsel %vm235, %v236, %v227
  %v238 = vsel %vm231, %v234, %v237
  %v239 = vsel %vm228, nan, %v238
  %vm240 = vcmask 64512
  %241 = vst.msk [vmem:[%s2] sm:$0xff] %vm240, %v135
  %242 = vst.msk [vmem:[%s2 + $0x8] sm:$0xff] %vm240, %v239
  %v243 = vand.u32 2147483647, %v30
  %vm244 = vcmp.le.f32.partialorder %v243, 0.7853982
  %vm245 = vcmp.lt.s32.totalorder %v30, 0
  %v246 = vand.u32 %v30, 2139095040
  %v247 = vshrl.u32 %v246, 23
  %v248 = vsub.s32 %v247, 127
  %v249 = vand.u32 2147483647, %v30
  %v250 = vand.u32 %v249, 8388607
  %v251 = vor.u32 %v250, 8388608
  %v252 = vsub.s32 0, %v251
  %v253 = vadd.s32 %v248, 1
  %vm254 = vcmp.gt.s32.totalorder %v253, 0
  %v255 = vsel %vm254, %v253, 0
  %v256 = vshrl.u32 %v255, 5
  %v257 = vand.u32 %v255, 31
  %v258 = vsub.s32 32, %v257
  %v259 = vshrl.u32 683565275, %v258
  %v260 = vshll.u32 683565275, %v257
  %v261 = vshrl.u32 2475754826, %v258
  %v262 = vor.u32 %v260, %v261
  %v263 = vshll.u32 2475754826, %v257
  %v264 = vshrl.u32 2131351028, %v258
  %v265 = vor.u32 %v263, %v264
  %v266 = vshll.u32 2131351028, %v257
  %v267 = vshrl.u32 2102212464, %v258
  %v268 = vor.u32 %v266, %v267
  %v269 = vshll.u32 2102212464, %v257
  %v270 = vshrl.u32 920167782, %v258
  %v271 = vor.u32 %v269, %v270
  %v272 = vshll.u32 920167782, %v257
  %v273 = vshrl.u32 1326507024, %v258
  %v274 = vor.u32 %v272, %v273
  %vm275 = vcmp.lt.s32.totalorder %v256, 1
  %vm276 = vcmp.lt.s32.totalorder %v256, 2
  %vm277 = vcmp.lt.s32.totalorder %v256, 3
  %vm278 = vcmp.lt.s32.totalorder %v256, 4
  %v279 = vsel %vm275, %v259, %v262
  %v280 = vsel %vm278, %v268, 2102212464
  %v281 = vsel %vm277, %v265, %v280
  %v282 = vsel %vm276, %v279, %v281
  %v283 = vsel %vm275, %v262, %v265
  %v284 = vsel %vm278, %v271, 920167782
  %v285 = vsel %vm277, %v268, %v284
  %v286 = vsel %vm276, %v283, %v285
  %v287 = vsel %vm275, %v265, %v268
  %v288 = vsel %vm278, %v274, 1326507024
  %v289 = vsel %vm277, %v271, %v288
  %v290 = vsel %vm276, %v287, %v289
  %v291 = vshll.u32 %v251, 8
  %v292 = vmul.u32.u64.compose %v291, %v290
  %v293 = vextract.low.u32 %v292
  %v294 = vextract.high.u32 %v292
  %v295 = vmul.u32.u64.compose %v291, %v286
  %v296 = vextract.low.u32 %v295
  %v297 = vextract.high.u32 %v295
  %v298 = vmul.u32 %v291, %v282
  %v299 = vadd.s32 %v294, %v296
  %vm300 = vc.u32 %v294, %v296
  %v301 = vadd.s32 %v297, 1
  %v302 = vsel %vm300, %v301, %v297
  %v303 = vadd.s32 %v298, %v302
  %v304 = vadd.s32 %v303, 536870912
  %v305 = vshrl.u32 %v304, 30
  %v306 = vshll.u32 %v305, 30
  %v307 = vsub.s32 %v303, %v306
  %vm308 = vcmp.lt.s32.totalorder %v307, 0
  %v309 = vsub.s32 0, %v307
  %v310 = vsel %vm308, %v309, %v307
  %v311 = vclz %v310
  %v312 = vsub.s32 %v311, 2
  %vm313 = vcmp.gt.s32.totalorder 0, %v312
  %v314 = vsel %vm313, 0, %v312
  %v315 = vsub.s32 32, %v314
  %v316 = vshll.u32 %v307, %v314
  %v317 = vshrl.u32 %v299, %v315
  %v318 = vor.u32 %v316, %v317
  %v319 = vsub.s32 4294967266, %v314
  %v320 = vadd.s32 %v319, 127
  %v321 = vshll.u32 %v320, 23
  %v322 = vor.u32 4788187, %v321
  %v323 = vand.u32 2147483647, %v322
  %v325 = vcvt.s32.f32 %v318
  %v326 = vmul.f32 %v325, %v323
  %v327 = vxor.u32 %v326, 2147483648
  %v328 = vsel %vm245, %v327, %v326
  %v329 = vsub.s32 4, %v305
  %v330 = vsel %vm245, %v329, %v305
  %v331 = vsel %vm244, %v30, %v328
  %v332 = vsel %vm244, 0, %v330
  %v333 = vcosq.f32.pop %v331
  %v334 = vsinq.f32.pop %v331
  %vm335 = vweird.f32 %v30
  %v336 = vand.u32 %v332, 3
  %vm337 = vcmp.lt.s32.totalorder %v336, 2
  %vm338 = vcmp.eq.s32.totalorder %v336, 0
  %v339 = vxor.u32 %v334, 2147483648
  %v340 = vsel %vm338, %v333, %v339
  %vm341 = vcmp.eq.s32.totalorder %v336, 2
  %v342 = vxor.u32 %v333, 2147483648
  %v343 = vsel %vm341, %v342, %v334
  %v344 = vsel %vm337, %v340, %v343
  %v345 = vsel %vm335, nan, %v344
  %v346 = vand.u32 2147483647, %v31
  %vm347 = vcmp.le.f32.partialorder %v346, 0.7853982
  %vm348 = vcmp.lt.s32.totalorder %v31, 0
  %v349 = vand.u32 %v31, 2139095040
  %v350 = vshrl.u32 %v349, 23
  %v351 = vsub.s32 %v350, 127
  %v352 = vand.u32 2147483647, %v31
  %v353 = vand.u32 %v352, 8388607
  %v354 = vor.u32 %v353, 8388608
  %v355 = vsub.s32 0, %v354
  %v356 = vadd.s32 %v351, 1
  %vm357 = vcmp.gt.s32.totalorder %v356, 0
  %v358 = vsel %vm357, %v356, 0
  %v359 = vshrl.u32 %v358, 5
  %v360 = vand.u32 %v358, 31
  %v361 = vsub.s32 32, %v360
  %v362 = vshrl.u32 683565275, %v361
  %v363 = vshll.u32 683565275, %v360
  %v364 = vshrl.u32 2475754826, %v361
  %v365 = vor.u32 %v363, %v364
  %v366 = vshll.u32 2475754826, %v360
  %v367 = vshrl.u32 2131351028, %v361
  %v368 = vor.u32 %v366, %v367
  %v369 = vshll.u32 2131351028, %v360
  %v370 = vshrl.u32 2102212464, %v361
  %v371 = vor.u32 %v369, %v370
  %v372 = vshll.u32 2102212464, %v360
  %v373 = vshrl.u32 920167782, %v361
  %v374 = vor.u32 %v372, %v373
  %v375 = vshll.u32 920167782, %v360
  %v376 = vshrl.u32 1326507024, %v361
  %v377 = vor.u32 %v375, %v376
  %vm378 = vcmp.lt.s32.totalorder %v359, 1
  %vm379 = vcmp.lt.s32.totalorder %v359, 2
  %vm380 = vcmp.lt.s32.totalorder %v359, 3
  %vm381 = vcmp.lt.s32.totalorder %v359, 4
  %v382 = vsel %vm378, %v362, %v365
  %v383 = vsel %vm381, %v371, 2102212464
  %v384 = vsel %vm380, %v368, %v383
  %v385 = vsel %vm379, %v382, %v384
  %v386 = vsel %vm378, %v365, %v368
  %v387 = vsel %vm381, %v374, 920167782
  %v388 = vsel %vm380, %v371, %v387
  %v389 = vsel %vm379, %v386, %v388
  %v390 = vsel %vm378, %v368, %v371
  %v391 = vsel %vm381, %v377, 1326507024
  %v392 = vsel %vm380, %v374, %v391
  %v393 = vsel %vm379, %v390, %v392
  %v394 = vshll.u32 %v354, 8
  %v395 = vmul.u32.u64.compose %v394, %v393
  %v396 = vextract.low.u32 %v395
  %v397 = vextract.high.u32 %v395
  %v398 = vmul.u32.u64.compose %v394, %v389
  %v399 = vextract.low.u32 %v398
  %v400 = vextract.high.u32 %v398
  %v401 = vmul.u32 %v394, %v385
  %v402 = vadd.s32 %v397, %v399
  %vm403 = vc.u32 %v397, %v399
  %v404 = vadd.s32 %v400, 1
  %v405 = vsel %vm403, %v404, %v400
  %v406 = vadd.s32 %v401, %v405
  %v407 = vadd.s32 %v406, 536870912
  %v408 = vshrl.u32 %v407, 30
  %v409 = vshll.u32 %v408, 30
  %v410 = vsub.s32 %v406, %v409
  %vm411 = vcmp.lt.s32.totalorder %v410, 0
  %v412 = vsub.s32 0, %v410
  %v413 = vsel %vm411, %v412, %v410
  %v414 = vclz %v413
  %v415 = vsub.s32 %v414, 2
  %vm416 = vcmp.gt.s32.totalorder 0, %v415
  %v417 = vsel %vm416, 0, %v415
  %v418 = vsub.s32 32, %v417
  %v419 = vshll.u32 %v410, %v417
  %v420 = vshrl.u32 %v402, %v418
  %v421 = vor.u32 %v419, %v420
  %v422 = vsub.s32 4294967266, %v417
  %v423 = vadd.s32 %v422, 127
  %v424 = vshll.u32 %v423, 23
  %v425 = vor.u32 4788187, %v424
  %v426 = vand.u32 2147483647, %v425
  %v428 = vcvt.s32.f32 %v421
  %v429 = vmul.f32 %v428, %v426
  %v430 = vxor.u32 %v429, 2147483648
  %v431 = vsel %vm348, %v430, %v429
  %v432 = vsub.s32 4, %v408
  %v433 = vsel %vm348, %v432, %v408
  %v434 = vsel %vm347, %v31, %v431
  %v435 = vsel %vm347, 0, %v433
  %v436 = vcosq.f32.pop %v434
  %v437 = vsinq.f32.pop %v434
  %vm438 = vweird.f32 %v31
  %v439 = vand.u32 %v435, 3
  %vm440 = vcmp.lt.s32.totalorder %v439, 2
  %vm441 = vcmp.eq.s32.totalorder %v439, 0
  %v442 = vxor.u32 %v437, 2147483648
  %v443 = vsel %vm441, %v436, %v442
  %vm444 = vcmp.eq.s32.totalorder %v439, 2
  %v445 = vxor.u32 %v436, 2147483648
  %v446 = vsel %vm444, %v445, %v437
  %v447 = vsel %vm440, %v443, %v446
  %v448 = vsel %vm438, nan, %v447
  %449 = vst.msk [vmem:[%s2 + $0x10] sm:$0xff] %vm240, %v345
  %450 = vst.msk [vmem:[%s2 + $0x18] sm:$0xff] %vm240, %v448
  // Predicated region
  $region10: #{_gfp_forward.1} parent=0 // pred_check
    _
  $region11: #{_gfp_forward.1} parent=0 // pred_check_branch
    %452 = sbr.rel (0) target = $region13
  $region12: #{_gfp_forward.1} parent=0 // pred_region
    _
  $region13: #{_gfp_forward.1} parent=0 // pred_fallthru
    _
  // Predicated region
  $region14: #{_gfp_forward.1} parent=0 // pred_check
    _
  $region15: #{_gfp_forward.1} parent=0 // pred_check_branch
    %454 = sbr.rel (0) target = $region17
  $region16: #{_gfp_forward.1} parent=0 // pred_region
    _
  $region17: #{_gfp_forward.1} parent=0 // pred_fallthru
    _

</llo_original>
